<compile_context>
chip_gen: v7x
topology: tpu7x:2x2x1
jax: 0.10.0
libtpu: 0.0.40
codegen_flags: <defaults>
</compile_context>

<pallas_src>
import math
from functools import partial

import jax
import jax.numpy as jnp
from jax import lax
from jax.experimental import pallas as pl
from jax.experimental.pallas import tpu as pltpu

# Finite "minus infinity" so the first kv block / fully masked rows never
# produce inf - inf = NaN in the online-softmax rescale.
_NEG_INF = -0.7 * float(jnp.finfo(jnp.float32).max)
_LANE = 128


# ---------------------------------------------------------------------------
# Pallas kernel: flash attention over a (rank, batch, head-group, q, kv) grid
# ---------------------------------------------------------------------------
def _flash_attn_kernel(q_ref, k_ref, v_ref, mask_ref, o_ref,
                       m_sc, l_sc, acc_sc, *, scale):
    # blocks: q/o -> (1, 1, Hblk, tq, D); k/v -> (1, 1, Hblk, tk, D);
    #         mask -> (1, 1, tq, tk); scratch -> (Hblk, tq, {1,D}) f32
    ki = pl.program_id(4)

    @pl.when(ki == 0)
    def _init():
        m_sc[...] = jnp.full_like(m_sc, _NEG_INF)
        l_sc[...] = jnp.zeros_like(l_sc)
        acc_sc[...] = jnp.zeros_like(acc_sc)

    # Scale on q: tq*D multiplies instead of tq*tk on the score tile.
    q = q_ref[0, 0] * scale                      # [Hblk, tq, D] (compute dtype)
    k = k_ref[0, 0]                              # [Hblk, tk, D]
    v = v_ref[0, 0]                              # [Hblk, tk, D]
    m = mask_ref[0, 0].astype(jnp.float32)       # [tq, tk], shared by all heads

    # Batched QK^T on the MXU, f32 accumulation.
    s = jnp.einsum("hqd,hkd->hqk", q, k,
                   preferred_element_type=jnp.float32)        # [Hblk, tq, tk]
    s = s + m[None]

    m_prev = m_sc[...]                                        # [Hblk, tq, 1]
    m_new = jnp.maximum(m_prev, jnp.max(s, axis=-1, keepdims=True))
    alpha = jnp.exp(m_prev - m_new)                           # rescale old state
    p = jnp.exp(s - m_new)                                    # [Hblk, tq, tk]

    l_sc[...] = alpha * l_sc[...] + jnp.sum(p, axis=-1, keepdims=True)
    acc_sc[...] = alpha * acc_sc[...] + jnp.einsum(
        "hqk,hkd->hqd", p.astype(v.dtype), v,
        preferred_element_type=jnp.float32)
    m_sc[...] = m_new

    @pl.when(ki == pl.num_programs(4) - 1)
    def _finalize():
        l = l_sc[...]
        l_safe = jnp.where(l > 0.0, l, 1.0)          # fully-masked-row guard
        inv = pl.reciprocal(l_safe, approx=True)     # EUP slot (cheap)
        inv = inv * (2.0 - l_safe * inv)             # one Newton step (~f32)
        o_ref[0, 0] = (acc_sc[...] * inv).astype(o_ref.dtype)


# ---------------------------------------------------------------------------
# Tiling / VMEM helpers
# ---------------------------------------------------------------------------
def _pick_tile(S, pref, quanta):
    """Largest tile <= pref that divides S and is a multiple of one of `quanta`
    (tried in order); falls back to the full axis, which is always legal."""
    if S <= pref:
        return S
    for q in quanta:
        t = (pref // q) * q
        while t >= q:
            if S % t == 0:
                return t
            t -= q
    return S


def _round_up(x, m):
    return ((x + m - 1) // m) * m


def _vmem_need(hb, tq, tk, D, in_sz, out_sz, mask_sz):
    """Approx VMEM bytes: double-buffered in/out blocks + f32 scratch
    (lane-padded)."""
    d_pad = _round_up(D, _LANE)
    q_b = hb * tq * d_pad * in_sz
    kv_b = hb * tk * d_pad * in_sz
    m_b = tq * _round_up(tk, _LANE) * mask_sz
    o_b = hb * tq * d_pad * out_sz
    scr = hb * tq * (2 * _LANE + d_pad) * 4          # m, l, acc (f32)
    return 2 * (q_b + 2 * kv_b + m_b) + 2 * o_b + scr


# ---------------------------------------------------------------------------
# Local attention wrapper (one fused pallas_call for all virtual ranks)
# ---------------------------------------------------------------------------
def pallas_local_attention(query, key, value, attention_mask, *args,
                           position_ids=None, tq=None, tk=None,
                           head_block=None, compute_dtype=jnp.bfloat16,
                           **kwargs):
    """Fused flash-attention local attention.

    query/key/value: [R, B, S, Hl, D] (rank-stacked) or [B, S, Hl, D], torch
    layout.  attention_mask: additive float mask [B, 1, S, S] (broadcast over
    heads).  Returns the same layout as q/k/v.  compute_dtype=bfloat16
    (default) feeds the native bf16 MXU; accumulation is always f32 and the
    output keeps the input dtype.
    """
    squeeze = query.ndim == 4
    if squeeze:
        query, key, value = (x[None] for x in (query, key, value))

    R, B, S, Hl, D = query.shape
    out_dtype = query.dtype
    scale = 1.0 / math.sqrt(D)
    cdt = out_dtype if compute_dtype is None else compute_dtype

    # Head-major 5-D layout; under jit these transposes/casts fuse with the
    # all-to-all permute/reshape chain that produced q/k/v.
    qt = jnp.transpose(query, (0, 1, 3, 2, 4)).astype(cdt)
    kt = jnp.transpose(key, (0, 1, 3, 2, 4)).astype(cdt)
    vt = jnp.transpose(value, (0, 1, 3, 2, 4)).astype(cdt)
    mask = attention_mask.astype(cdt)      # bf16 mask halves its HBM traffic

    # Tiles: tq is a sublane dim (prefer multiples of 128, >=16 for bf16
    # packing); tk is also the mask block's lane dim (multiple of 128 or full).
    tq = _pick_tile(S, 512 if tq is None else tq, (128, 16, 8))
    tk = _pick_tile(S, 512 if tk is None else tk, (128,))
    nq, nk = S // tq, S // tk

    # Chip-aware VMEM budget (v7x has 64 MiB/TC; v5e/v6e 128 MiB).
    try:
        vmem_cap = int(getattr(pltpu.get_tpu_info(), "vmem_capacity_bytes",
                               64 * 2**20))
    except Exception:
        vmem_cap = 64 * 2**20
    in_sz = jnp.dtype(cdt).itemsize
    out_sz = jnp.dtype(out_dtype).itemsize
    mask_sz = jnp.dtype(mask.dtype).itemsize
    budget = min(vmem_cap // 2, 36 * 2**20)

    # Head batching: share each (tq, tk) mask block across hb heads and
    # amortize per-grid-step overhead; biggest divisor of Hl within budget.
    if head_block is None:
        hb = 1
        for cand in range(1, min(Hl, 16) + 1):
            if Hl % cand == 0 and _vmem_need(cand, tq, tk, D, in_sz, out_sz,
                                             mask_sz) <= budget:
                hb = cand
    else:
        hb = head_block
    nh = Hl // hb

    need = _vmem_need(hb, tq, tk, D, in_sz, out_sz, mask_sz)
    vmem_limit = int(min(48 * 2**20, need + 8 * 2**20))   # no 32 MiB floor

    q_spec = pl.BlockSpec((1, 1, hb, tq, D),
                          lambda r, b, h, qi, ki: (r, b, h, qi, 0))
    kv_spec = pl.BlockSpec((1, 1, hb, tk, D),
                           lambda r, b, h, qi, ki: (r, b, h, ki, 0))
    mask_spec = pl.BlockSpec((1, 1, tq, tk),
                             lambda r, b, h, qi, ki: (b, 0, qi, ki))
    out_spec = pl.BlockSpec((1, 1, hb, tq, D),
                            lambda r, b, h, qi, ki: (r, b, h, qi, 0))

    # TODO(synk): for head_dim < 128 the q/k/v/o lane dim is under-utilized;
    # folding heads into the output lane axis needs an in-kernel (h,q,d)->(q,hd)
    # relayout and is not done here.
    # TODO(synk): on v5e a deeper kv/mask pipeline (pipeline_mode=pl.Buffered(3))
    # would hide exposed DMA latency; kept at default depth for portability.

    out = pl.pallas_call(
        partial(_flash_attn_kernel, scale=scale),
        out_shape=jax.ShapeDtypeStruct((R, B, Hl, S, D), out_dtype),
        grid_spec=pltpu.PrefetchScalarGridSpec(
            num_scalar_prefetch=0,
            grid=(R, B, nh, nq, nk),
            in_specs=[q_spec, kv_spec, kv_spec, mask_spec],
            out_specs=out_spec,
            scratch_shapes=[pltpu.VMEM((hb, tq, 1), jnp.float32),   # running max
                            pltpu.VMEM((hb, tq, 1), jnp.float32),   # running sum
                            pltpu.VMEM((hb, tq, D), jnp.float32)],  # f32 acc
        ),
        compiler_params=pltpu.CompilerParams(
            dimension_semantics=("parallel", "parallel", "parallel",
                                 "parallel", "arbitrary"),
            vmem_limit_bytes=vmem_limit),
    )(qt, kt, vt, mask)

    out = jnp.transpose(out, (0, 1, 3, 2, 4))        # back to [R, B, S, Hl, D]
    return out[0] if squeeze else out


# ---------------------------------------------------------------------------
# Exact layout math from the torch reference (pure glue, vectorized over ranks)
# ---------------------------------------------------------------------------
def _generate_layout_params(scatter_idx, seq_world_size, inp):
    if scatter_idx < 2:
        bs, global_seq_len, num_local_head, head_dim = inp.shape
        pre_shape = [bs, seq_world_size, global_seq_len // seq_world_size,
                     num_local_head, head_dim]
        pre_perm = (1, 0, 2, 3, 4)
        post_perm = (1, 2, 0, 3, 4)
        post_shape = [bs, global_seq_len // seq_world_size,
                      seq_world_size * num_local_head, head_dim]
    else:
        bs, local_seq_len, num_total_head, head_dim = inp.shape
        assert num_total_head % seq_world_size == 0
        pre_shape = [bs, local_seq_len, seq_world_size,
                     num_total_head // seq_world_size, head_dim]
        pre_perm = (2, 0, 1, 3, 4)
        post_perm = (1, 0, 2, 3, 4)
        post_shape = [bs, seq_world_size * local_seq_len,
                      num_total_head // seq_world_size, head_dim]
    return pre_perm, pre_shape, post_perm, post_shape


def single_all_to_all_sim(x, scatter_idx, gather_idx, world_size):
    """Emulate dist.all_to_all_single across `world_size` virtual ranks.
    x: rank-stacked tensor [world_size, *per_rank_shape]."""
    pre_perm, pre_shape, post_perm, post_shape = _generate_layout_params(
        scatter_idx, world_size, x[0])
    pre = jnp.transpose(x.reshape((world_size,) + tuple(pre_shape)),
                        (0,) + tuple(p + 1 for p in pre_perm))
    # output_on_rank[r][w] = input_on_rank[w][r]
    exchanged = jnp.swapaxes(pre, 0, 1)
    post = jnp.transpose(exchanged, (0,) + tuple(p + 1 for p in post_perm))
    return post.reshape((world_size,) + tuple(post_shape))


class DistributedAttention:
    """JAX port of the torch DistributedAttention module (single-device
    simulation of `world_size` sequence-parallel ranks).  The local attention
    receives the rank-stacked tensors and runs as ONE fused Pallas kernel."""

    def __init__(self, local_attention, world_size, scatter_idx=2, gather_idx=1):
        self.local_attn = local_attention
        self.world_size = world_size
        self.scatter_idx = scatter_idx
        self.gather_idx = gather_idx
        self._jit_forward = jax.jit(self._forward_impl)

    def _forward_impl(self, q_stack, k_stack, v_stack, attention_mask):
        W = self.world_size
        q_layers = single_all_to_all_sim(q_stack, self.scatter_idx, self.gather_idx, W)
        k_layers = single_all_to_all_sim(k_stack, self.scatter_idx, self.gather_idx, W)
        v_layers = single_all_to_all_sim(v_stack, self.scatter_idx, self.gather_idx, W)
        context = self.local_attn(q_layers, k_layers, v_layers, attention_mask)
        return single_all_to_all_sim(context, self.gather_idx, self.scatter_idx, W)

    def forward(self, query_per_rank, key_per_rank, value_per_rank,
                attention_mask, *args, **kwargs):
        # TODO(synk): position_ids all_gather path not exercised (local_attn
        # here does not consume position_ids); kwargs pop mirrored for parity.
        kwargs.pop("position_ids", None)
        q_stack = jnp.stack(query_per_rank)
        k_stack = jnp.stack(key_per_rank)
        v_stack = jnp.stack(value_per_rank)
        out_stack = self._jit_forward(q_stack, k_stack, v_stack, attention_mask)
        return [out_stack[r] for r in range(self.world_size)]


# ---------------------------------------------------------------------------
# Reference (pure JAX) for validation
# ---------------------------------------------------------------------------
def reference_global_attention(q, k, v, mask):
    B, S, H, D = q.shape
    qt = jnp.transpose(q, (0, 2, 1, 3))
    kt = jnp.transpose(k, (0, 2, 1, 3))
    vt = jnp.transpose(v, (0, 2, 1, 3))
    s = jnp.einsum("bhqd,bhkd->bhqk", qt, kt) / math.sqrt(D) + mask
    p = jax.nn.softmax(s, axis=-1)
    o = jnp.einsum("bhqk,bhkd->bhqd", p, vt)
    return jnp.transpose(o, (0, 2, 1, 3))  # [B, S, H, D]


if __name__ == "__main__":
    key_rng = jax.random.PRNGKey(0)

    WORLD_SIZE = 2
    B, S, H, D = 2, 16, 4, 32          # global seq S, total heads H
    local_seq = S // WORLD_SIZE

    k1, k2, k3, k4 = jax.random.split(key_rng, 4)
    q_glob = jax.random.normal(k1, (B, S, H, D), dtype=jnp.float32)
    k_glob = jax.random.normal(k2, (B, S, H, D), dtype=jnp.float32)
    v_glob = jax.random.normal(k3, (B, S, H, D), dtype=jnp.float32)
    attn_mask = 0.1 * jax.random.normal(k4, (B, 1, S, S), dtype=jnp.float32)

    # shard the global sequence across virtual ranks (torch layout per rank)
    q_rank = [q_glob[:, r * local_seq:(r + 1) * local_seq] for r in range(WORLD_SIZE)]
    k_rank = [k_glob[:, r * local_seq:(r + 1) * local_seq] for r in range(WORLD_SIZE)]
    v_rank = [v_glob[:, r * local_seq:(r + 1) * local_seq] for r in range(WORLD_SIZE)]

    ref = reference_global_attention(q_glob, k_glob, v_glob, attn_mask)

    # Default path: bf16 compute on the MXU, f32 accumulation.
    dist_attn = DistributedAttention(pallas_local_attention, WORLD_SIZE,
                                     scatter_idx=2, gather_idx=1)
    outputs = dist_attn.forward(q_rank, k_rank, v_rank, attn_mask)
    outputs = [jax.block_until_ready(o) for o in outputs]
    out_full = jnp.concatenate(outputs, axis=1)            # [B, S, H, D]
    assert out_full.shape == ref.shape
    err_bf16 = float(jnp.max(jnp.abs(out_full - ref)))
    assert err_bf16 < 7.5e-2, f"bf16 path max abs err {err_bf16}"

    # f32 parity path (same kernel, compute_dtype=float32).
    dist_attn_f32 = DistributedAttention(
        partial(pallas_local_attention, compute_dtype=jnp.float32),
        WORLD_SIZE, scatter_idx=2, gather_idx=1)
    outputs32 = dist_attn_f32.forward(q_rank, k_rank, v_rank, attn_mask)
    outputs32 = [jax.block_until_ready(o) for o in outputs32]
    out_full32 = jnp.concatenate(outputs32, axis=1)
    err_f32 = float(jnp.max(jnp.abs(out_full32 - ref)))
    assert err_f32 < 2e-3, f"f32 path max abs err {err_f32}"

    print("KERNEL_OK")
</pallas_src>

<mosaic_0001>
module attributes {stable_mosaic.version = 11 : i64} {
  func.func @_flash_attn_kernel(%arg0: i32, %arg1: i32, %arg2: i32, %arg3: i32, %arg4: i32, %arg5: memref<1x1x2x16x32xbf16, #tpu.memory_space<vmem>>, %arg6: memref<1x1x2x16x32xbf16, #tpu.memory_space<vmem>>, %arg7: memref<1x1x2x16x32xbf16, #tpu.memory_space<vmem>>, %arg8: memref<1x1x16x16xbf16, #tpu.memory_space<vmem>>, %arg9: memref<1x1x2x16x32xf32, #tpu.memory_space<vmem>>, %arg10: memref<2x16x1xf32, #tpu.memory_space<vmem>>, %arg11: memref<2x16x1xf32, #tpu.memory_space<vmem>>, %arg12: memref<2x16x32xf32, #tpu.memory_space<vmem>>) attributes {dimension_semantics = [#tpu.dimension_semantics<parallel>, #tpu.dimension_semantics<parallel>, #tpu.dimension_semantics<parallel>, #tpu.dimension_semantics<parallel>, #tpu.dimension_semantics<arbitrary>], iteration_bounds = array<i64: 2, 2, 1, 1, 1>, scalar_prefetch = 0 : i64, scratch_operands = 3 : i64, tpu.core_type = #tpu.core_type<tc>, window_params = [{transform_indices = @transform_0, window_bounds = array<i64: 1, 1, 2, 16, 32>}, {transform_indices = @transform_1, window_bounds = array<i64: 1, 1, 2, 16, 32>}, {transform_indices = @transform_2, window_bounds = array<i64: 1, 1, 2, 16, 32>}, {transform_indices = @transform_3, window_bounds = array<i64: 1, 1, 16, 16>}, {transform_indices = @transform_4, window_bounds = array<i64: 1, 1, 2, 16, 32>}]} {
    %c0_i32 = arith.constant 0 : i32
    %0 = arith.cmpi eq, %arg4, %c0_i32 : i32
    %1 = arith.extui %0 : i1 to i32
    %c0_i32_0 = arith.constant 0 : i32
    %2 = arith.cmpi ne, %1, %c0_i32_0 : i32
    scf.if %2 {
      %cst_43 = arith.constant -2.38197633E+38 : f32
      %44 = vector.broadcast %cst_43 : f32 to vector<2x16x1xf32>
      %c0_44 = arith.constant 0 : index
      %c0_45 = arith.constant 0 : index
      %c0_46 = arith.constant 0 : index
      %45 = vector.load %arg10[%c0_44, %c0_45, %c0_46] : memref<2x16x1xf32, #tpu.memory_space<vmem>>, vector<2x16x1xf32>
      tpu.vector_store %arg10[%c0_44, %c0_45, %c0_46], %44 {strides = array<i32>} : memref<2x16x1xf32, #tpu.memory_space<vmem>>, vector<2x16x1xf32>,
      %cst_47 = arith.constant 0.000000e+00 : f32
      %46 = vector.broadcast %cst_47 : f32 to vector<2x16x1xf32>
      %c0_48 = arith.constant 0 : index
      %c0_49 = arith.constant 0 : index
      %c0_50 = arith.constant 0 : index
      %47 = vector.load %arg11[%c0_48, %c0_49, %c0_50] : memref<2x16x1xf32, #tpu.memory_space<vmem>>, vector<2x16x1xf32>
      tpu.vector_store %arg11[%c0_48, %c0_49, %c0_50], %46 {strides = array<i32>} : memref<2x16x1xf32, #tpu.memory_space<vmem>>, vector<2x16x1xf32>,
      %cst_51 = arith.constant 0.000000e+00 : f32
      %48 = vector.broadcast %cst_51 : f32 to vector<2x16x32xf32>
      %c0_52 = arith.constant 0 : index
      %c0_53 = arith.constant 0 : index
      %c0_54 = arith.constant 0 : index
      %49 = vector.load %arg12[%c0_52, %c0_53, %c0_54] : memref<2x16x32xf32, #tpu.memory_space<vmem>>, vector<2x16x32xf32>
      tpu.vector_store %arg12[%c0_52, %c0_53, %c0_54], %48 {strides = array<i32>} : memref<2x16x32xf32, #tpu.memory_space<vmem>>, vector<2x16x32xf32>,
    } else {
    }
    %c0 = arith.constant 0 : index
    %c0_1 = arith.constant 0 : index
    %c0_2 = arith.constant 0 : index
    %c0_3 = arith.constant 0 : index
    %c0_4 = arith.constant 0 : index
    %3 = vector.load %arg5[%c0, %c0_1, %c0_2, %c0_3, %c0_4] : memref<1x1x2x16x32xbf16, #tpu.memory_space<vmem>>, vector<1x1x2x16x32xbf16>
    %4 = vector.shape_cast %3 : vector<1x1x2x16x32xbf16> to vector<2x16x32xbf16>
    %cst = arith.constant 1.767580e-01 : bf16
    %5 = vector.broadcast %cst : bf16 to vector<2x16x32xbf16>
    %6 = arith.mulf %4, %5 : vector<2x16x32xbf16>
    %c0_5 = arith.constant 0 : index
    %c0_6 = arith.constant 0 : index
    %c0_7 = arith.constant 0 : index
    %c0_8 = arith.constant 0 : index
    %c0_9 = arith.constant 0 : index
    %7 = vector.load %arg6[%c0_5, %c0_6, %c0_7, %c0_8, %c0_9] : memref<1x1x2x16x32xbf16, #tpu.memory_space<vmem>>, vector<1x1x2x16x32xbf16>
    %8 = vector.shape_cast %7 : vector<1x1x2x16x32xbf16> to vector<2x16x32xbf16>
    %c0_10 = arith.constant 0 : index
    %c0_11 = arith.constant 0 : index
    %c0_12 = arith.constant 0 : index
    %c0_13 = arith.constant 0 : index
    %c0_14 = arith.constant 0 : index
    %9 = vector.load %arg7[%c0_10, %c0_11, %c0_12, %c0_13, %c0_14] : memref<1x1x2x16x32xbf16, #tpu.memory_space<vmem>>, vector<1x1x2x16x32xbf16>
    %10 = vector.shape_cast %9 : vector<1x1x2x16x32xbf16> to vector<2x16x32xbf16>
    %c0_15 = arith.constant 0 : index
    %c0_16 = arith.constant 0 : index
    %c0_17 = arith.constant 0 : index
    %c0_18 = arith.constant 0 : index
    %11 = vector.load %arg8[%c0_15, %c0_16, %c0_17, %c0_18] : memref<1x1x16x16xbf16, #tpu.memory_space<vmem>>, vector<1x1x16x16xbf16>
    %12 = vector.shape_cast %11 : vector<1x1x16x16xbf16> to vector<16x16xbf16>
    %13 = arith.extf %12 : vector<16x16xbf16> to vector<16x16xf32>
    "tpu.trace_start"() <{level = 10 : i32, message = "hqd,hkd->hqk"}> : () -> ()
    %cst_19 = arith.constant dense<0.000000e+00> : vector<2x16x16xf32>
    %14 = tpu.matmul %6, %8, %cst_19 {dimension_numbers = #tpu.dot_dimension_numbers<[2], [2], [1], [1], [0, 0, 0, 1, 1, 1], [0], [0]>} : vector<2x16x32xbf16>, vector<2x16x32xbf16>, vector<2x16x16xf32> -> vector<2x16x16xf32>
    "tpu.trace_stop"() : () -> ()
    %15 = vector.shape_cast %13 : vector<16x16xf32> to vector<1x16x16xf32>
    %16 = vector.broadcast %15 : vector<1x16x16xf32> to vector<2x16x16xf32>
    %17 = arith.addf %14, %16 : vector<2x16x16xf32>
    %c0_20 = arith.constant 0 : index
    %c0_21 = arith.constant 0 : index
    %c0_22 = arith.constant 0 : index
    %18 = vector.load %arg10[%c0_20, %c0_21, %c0_22] : memref<2x16x1xf32, #tpu.memory_space<vmem>>, vector<2x16x1xf32>
    %cst_23 = arith.constant dense<0xFF800000> : vector<2x16xf32>
    %19 = vector.multi_reduction <maximumf>, %17, %cst_23 [2] : vector<2x16x16xf32> to vector<2x16xf32>
    %20 = vector.shape_cast %19 : vector<2x16xf32> to vector<2x16x1xf32>
    %21 = arith.maximumf %18, %20 : vector<2x16x1xf32>
    %22 = arith.subf %18, %21 : vector<2x16x1xf32>
    %23 = math.exp %22 : vector<2x16x1xf32>
    %24 = vector.broadcast %21 : vector<2x16x1xf32> to vector<2x16x16xf32>
    %25 = arith.subf %17, %24 : vector<2x16x16xf32>
    %26 = math.exp %25 : vector<2x16x16xf32>
    %c0_24 = arith.constant 0 : index
    %c0_25 = arith.constant 0 : index
    %c0_26 = arith.constant 0 : index
    %27 = vector.load %arg11[%c0_24, %c0_25, %c0_26] : memref<2x16x1xf32, #tpu.memory_space<vmem>>, vector<2x16x1xf32>
    %28 = arith.mulf %23, %27 : vector<2x16x1xf32>
    %cst_27 = arith.constant dense<0.000000e+00> : vector<2x16xf32>
    %29 = vector.multi_reduction <add>, %26, %cst_27 [2] : vector<2x16x16xf32> to vector<2x16xf32>
    %30 = vector.shape_cast %29 : vector<2x16xf32> to vector<2x16x1xf32>
    %31 = arith.addf %28, %30 : vector<2x16x1xf32>
    %c0_28 = arith.constant 0 : index
    %c0_29 = arith.constant 0 : index
    %c0_30 = arith.constant 0 : index
    %32 = vector.load %arg11[%c0_28, %c0_29, %c0_30] : memref<2x16x1xf32, #tpu.memory_space<vmem>>, vector<2x16x1xf32>
    tpu.vector_store %arg11[%c0_28, %c0_29, %c0_30], %31 {strides = array<i32>} : memref<2x16x1xf32, #tpu.memory_space<vmem>>, vector<2x16x1xf32>,
    %c0_31 = arith.constant 0 : index
    %c0_32 = arith.constant 0 : index
    %c0_33 = arith.constant 0 : index
    %33 = vector.load %arg12[%c0_31, %c0_32, %c0_33] : memref<2x16x32xf32, #tpu.memory_space<vmem>>, vector<2x16x32xf32>
    %34 = vector.broadcast %23 : vector<2x16x1xf32> to vector<2x16x32xf32>
    %35 = arith.mulf %34, %33 : vector<2x16x32xf32>
    %36 = arith.truncf %26 : vector<2x16x16xf32> to vector<2x16x16xbf16>
    "tpu.trace_start"() <{level = 10 : i32, message = "hqk,hkd->hqd"}> : () -> ()
    %cst_34 = arith.constant dense<0.000000e+00> : vector<2x16x32xf32>
    %37 = tpu.matmul %36, %10, %cst_34 {dimension_numbers = #tpu.dot_dimension_numbers<[2], [1], [1], [2], [0, 0, 0, 1, 1, 2], [0], [0]>} : vector<2x16x16xbf16>, vector<2x16x32xbf16>, vector<2x16x32xf32> -> vector<2x16x32xf32>
    "tpu.trace_stop"() : () -> ()
    %38 = arith.addf %35, %37 : vector<2x16x32xf32>
    %c0_35 = arith.constant 0 : index
    %c0_36 = arith.constant 0 : index
    %c0_37 = arith.constant 0 : index
    %39 = vector.load %arg12[%c0_35, %c0_36, %c0_37] : memref<2x16x32xf32, #tpu.memory_space<vmem>>, vector<2x16x32xf32>
    tpu.vector_store %arg12[%c0_35, %c0_36, %c0_37], %38 {strides = array<i32>} : memref<2x16x32xf32, #tpu.memory_space<vmem>>, vector<2x16x32xf32>,
    %c0_38 = arith.constant 0 : index
    %c0_39 = arith.constant 0 : index
    %c0_40 = arith.constant 0 : index
    %40 = vector.load %arg10[%c0_38, %c0_39, %c0_40] : memref<2x16x1xf32, #tpu.memory_space<vmem>>, vector<2x16x1xf32>
    tpu.vector_store %arg10[%c0_38, %c0_39, %c0_40], %21 {strides = array<i32>} : memref<2x16x1xf32, #tpu.memory_space<vmem>>, vector<2x16x1xf32>,
    %c0_i32_41 = arith.constant 0 : i32
    %41 = arith.cmpi eq, %arg4, %c0_i32_41 : i32
    %42 = arith.extui %41 : i1 to i32
    %c0_i32_42 = arith.constant 0 : i32
    %43 = arith.cmpi ne, %42, %c0_i32_42 : i32
    scf.if %43 {
      %c0_43 = arith.constant 0 : index
      %c0_44 = arith.constant 0 : index
      %c0_45 = arith.constant 0 : index
      %44 = vector.load %arg11[%c0_43, %c0_44, %c0_45] : memref<2x16x1xf32, #tpu.memory_space<vmem>>, vector<2x16x1xf32>
      %cst_46 = arith.constant 0.000000e+00 : f32
      %45 = vector.broadcast %cst_46 : f32 to vector<2x16x1xf32>
      %46 = arith.cmpf ogt, %44, %45 : vector<2x16x1xf32>
      %cst_47 = arith.constant 1.000000e+00 : f32
      %47 = vector.broadcast %cst_47 : f32 to vector<2x16x1xf32>
      %48 = arith.select %46, %44, %47 : vector<2x16x1xi1>, vector<2x16x1xf32>
      %49 = tpu.reciprocal %48 {approx = true} : vector<2x16x1xf32> -> vector<2x16x1xf32>
      %50 = arith.mulf %48, %49 : vector<2x16x1xf32>
      %cst_48 = arith.constant 2.000000e+00 : f32
      %51 = vector.broadcast %cst_48 : f32 to vector<2x16x1xf32>
      %52 = arith.subf %51, %50 : vector<2x16x1xf32>
      %53 = arith.mulf %49, %52 : vector<2x16x1xf32>
      %c0_49 = arith.constant 0 : index
      %c0_50 = arith.constant 0 : index
      %c0_51 = arith.constant 0 : index
      %54 = vector.load %arg12[%c0_49, %c0_50, %c0_51] : memref<2x16x32xf32, #tpu.memory_space<vmem>>, vector<2x16x32xf32>
      %55 = vector.broadcast %53 : vector<2x16x1xf32> to vector<2x16x32xf32>
      %56 = arith.mulf %54, %55 : vector<2x16x32xf32>
      %c0_52 = arith.constant 0 : index
      %c0_53 = arith.constant 0 : index
      %c0_54 = arith.constant 0 : index
      %c0_55 = arith.constant 0 : index
      %c0_56 = arith.constant 0 : index
      %57 = vector.load %arg9[%c0_52, %c0_53, %c0_54, %c0_55, %c0_56] : memref<1x1x2x16x32xf32, #tpu.memory_space<vmem>>, vector<1x1x2x16x32xf32>
      %58 = vector.shape_cast %57 : vector<1x1x2x16x32xf32> to vector<2x16x32xf32>
      %59 = vector.shape_cast %56 : vector<2x16x32xf32> to vector<1x1x2x16x32xf32>
      tpu.vector_store %arg9[%c0_52, %c0_53, %c0_54, %c0_55, %c0_56], %59 {strides = array<i32>} : memref<1x1x2x16x32xf32, #tpu.memory_space<vmem>>, vector<1x1x2x16x32xf32>,
    } else {
    }
    return
  }
  func.func @transform_0(%arg0: i32, %arg1: i32, %arg2: i32, %arg3: i32, %arg4: i32) -> (i32, i32, i32, i32, i32) {
    %c0_i32 = arith.constant 0 : i32
    %c0_i32_0 = arith.constant 0 : i32
    return %arg0, %arg1, %arg2, %arg3, %c0_i32 : i32, i32, i32, i32, i32
  }
  func.func @transform_1(%arg0: i32, %arg1: i32, %arg2: i32, %arg3: i32, %arg4: i32) -> (i32, i32, i32, i32, i32) {
    %c0_i32 = arith.constant 0 : i32
    %c0_i32_0 = arith.constant 0 : i32
    return %arg0, %arg1, %arg2, %arg4, %c0_i32 : i32, i32, i32, i32, i32
  }
  func.func @transform_2(%arg0: i32, %arg1: i32, %arg2: i32, %arg3: i32, %arg4: i32) -> (i32, i32, i32, i32, i32) {
    %c0_i32 = arith.constant 0 : i32
    %c0_i32_0 = arith.constant 0 : i32
    return %arg0, %arg1, %arg2, %arg4, %c0_i32 : i32, i32, i32, i32, i32
  }
  func.func @transform_3(%arg0: i32, %arg1: i32, %arg2: i32, %arg3: i32, %arg4: i32) -> (i32, i32, i32, i32) {
    %c0_i32 = arith.constant 0 : i32
    %c0_i32_0 = arith.constant 0 : i32
    return %arg1, %c0_i32, %arg3, %arg4 : i32, i32, i32, i32
  }
  func.func @transform_4(%arg0: i32, %arg1: i32, %arg2: i32, %arg3: i32, %arg4: i32) -> (i32, i32, i32, i32, i32) {
    %c0_i32 = arith.constant 0 : i32
    %c0_i32_0 = arith.constant 0 : i32
    return %arg0, %arg1, %arg2, %arg3, %c0_i32 : i32, i32, i32, i32, i32
  }
}

</mosaic_0001>

<llo_original>
// kernel: _forward_impl.1
$region0: #{_forward_impl.1}
  #allocation0 [shape = 'u32[]', space=smem, size = 0x4, offset = 0x4, fixed_abs, tag = 'smem constant byte address 0x4 - core index']
  #allocation1 [shape = 'u32[144,128]{1,0:T(1,128)}', space=vmem, size = 0x12000, scoped, tag = 'internal scratch']
  #allocation2 [shape = 'f32[2,16,1]{2,1,0:T(8,128)}', space=vmem, size = 0x4000, scoped, tag = 'scratch operand']
  #allocation3 [shape = 'f32[2,16,1]{2,1,0:T(8,128)}', space=vmem, size = 0x4000, scoped, tag = 'scratch operand']
  #allocation4 [shape = 'f32[2,16,32]{2,1,0:T(8,128)}', space=vmem, size = 0x4000, scoped, tag = 'scratch operand']
  %s0 = inlined_call_operand.vmem [shape: bf16[2,2,2,16,32], index: 0, kind: input, shape index: {}]
  %s1 = inlined_call_operand.vmem [shape: bf16[2,2,2,16,32], index: 1, kind: input, shape index: {}]
  %s2 = inlined_call_operand.vmem [shape: bf16[2,2,2,16,32], index: 2, kind: input, shape index: {}]
  %s3 = inlined_call_operand.vmem [shape: bf16[2,1,16,16], index: 3, kind: input, shape index: {}]
  %s4 = inlined_call_operand.vmem [shape: f32[2,2,2,16,32], index: 4, kind: output, shape index: {}]
  %s5 = sld [smem:[#allocation0]]
  $region57: #{_forward_impl.1} parent=0
    _
  %s7 = ssub.s32 1, %s5
  %s8 = scalar_select 0, %s7, %s5
  loop: start=0, step=1, limit=6
  $region2: #{_forward_impl.1} parent=0 // loop_pre_header
    _
  $region3: #{_forward_impl.1} parent=0 // loop_header
    %s10 = sphi 0, %s14
    %p11 = scmp.ge.s32.totalorder %s10, 6
    %s17 = sphi 0, %s50
    %s18 = sphi 0, %s46
    %s19 = sphi 0, %s42
    %s20 = sphi 0, %s38
    %s21 = sphi 0, %s34
    %s22 = sphi 0, %s17
    %s23 = sphi 0, %s18
    %s24 = sphi 0, %s19
    %s25 = sphi 0, %s20
    %s26 = sphi 0, %s21
    %s27 = sphi 0, %s22
    %s28 = sphi 0, %s23
    %s29 = sphi 0, %s24
    %s30 = sphi 0, %s25
    %s31 = sphi 0, %s26
    %s59 = sphi 0, %s61
    %s62 = sphi 0, %s59
    %s63 = sphi 0, %s62
    %s79 = sphi 0, %s63
    %s91 = sphi 0, %s93
    %s94 = sphi 0, %s91
    %s95 = sphi 0, %s94
    %s111 = sphi 0, %s95
    %s123 = sphi 0, %s125
    %s126 = sphi 0, %s123
    %s127 = sphi 0, %s126
    %s143 = sphi 0, %s127
    %s153 = sphi 0, %s155
    %s156 = sphi 0, %s153
    %s157 = sphi 0, %s156
    %s173 = sphi 0, %s157
    %s185 = sphi 0, %s187
    %s188 = sphi 0, %s185
    %s189 = sphi 0, %s188
    %s205 = sphi 0, %s189
  $region4: #{_forward_impl.1} parent=0 // loop_header_branch
    %13 = sbr.rel (%p11) target = $region8
  $region5: #{_forward_impl.1} parent=0 // loop_body
    %s15 = ssub.s32 %s10, 1
    %s16 = ssub.s32 %s10, 2
    %s32 = sadd.s32 1, %s21
    %p33 = scmp.ge.s32.totalorder %s32, 1
    %s34 = scalar_select %p33, 0, %s32
    %s35 = sadd.s32 1, %s20
    %s36 = scalar_select %p33, %s35, %s20
    %p37 = scmp.ge.s32.totalorder %s36, 1
    %s38 = scalar_select %p37, 0, %s36
    %s39 = sadd.s32 1, %s19
    %s40 = scalar_select %p37, %s39, %s19
    %p41 = scmp.ge.s32.totalorder %s40, 1
    %s42 = scalar_select %p41, 0, %s40
    %s43 = sadd.s32 1, %s18
    %s44 = scalar_select %p41, %s43, %s18
    %p45 = scmp.ge.s32.totalorder %s44, 2
    %s46 = scalar_select %p45, 0, %s44
    %s47 = sadd.s32 1, %s17
    %s48 = scalar_select %p45, %s47, %s17
    %p49 = scmp.ge.s32.totalorder %s48, 2
    %s50 = scalar_select %p49, 0, %s48
    %s51 = ssub.s32 %s17, %s50
    %s52 = ssub.s32 %s18, %s46
    %s53 = sor.u32 %s51, %s52
    %s54 = ssub.s32 %s19, %s42
    %s55 = sor.u32 %s53, %s54
    %s56 = ssub.s32 %s20, %s38
    %s57 = sor.u32 %s55, %s56
    %p58 = scmp.eq.s32.totalorder %s57, 0
    %s60 = sadd.s32 %s59, 1
    %s61 = scalar_select %p58, %s59, %s60
    %p64 = pneg %p58
    %p65 = scmp.eq.s32.totalorder %s10, 3
    %p66 = por %p64, %p65
    %p67 = scmp.ne.s32.totalorder %s59, %s62
    %p68 = scmp.eq.s32.totalorder %s10, 0
    %p69 = por %p67, %p68
    %p70 = scmp.ne.s32.totalorder %s59, %s62
    %p71 = scmp.eq.s32.totalorder %s15, 3
    %p72 = por %p70, %p71
    %p73 = scmp.ne.s32.totalorder %s62, %s63
    %p74 = scmp.eq.s32.totalorder %s15, 0
    %p75 = por %p73, %p74
    %p76 = scmp.ne.s32.totalorder %s62, %s63
    %p77 = scmp.eq.s32.totalorder %s16, 3
    %p78 = por %p76, %p77
    %p80 = scmp.ne.s32.totalorder %s63, %s79
    %p81 = scmp.eq.s32.totalorder %s16, 0
    %p82 = por %p80, %p81
    %s83 = ssub.s32 %s17, %s50
    %s84 = ssub.s32 %s18, %s46
    %s85 = sor.u32 %s83, %s84
    %s86 = ssub.s32 %s19, %s42
    %s87 = sor.u32 %s85, %s86
    %s88 = ssub.s32 %s21, %s34
    %s89 = sor.u32 %s87, %s88
    %p90 = scmp.eq.s32.totalorder %s89, 0
    %s92 = sadd.s32 %s91, 1
    %s93 = scalar_select %p90, %s91, %s92
    %p96 = pneg %p90
    %p97 = scmp.eq.s32.totalorder %s10, 3
    %p98 = por %p96, %p97
    %p99 = scmp.ne.s32.totalorder %s91, %s94
    %p100 = scmp.eq.s32.totalorder %s10, 0
    %p101 = por %p99, %p100
    %p102 = scmp.ne.s32.totalorder %s91, %s94
    %p103 = scmp.eq.s32.totalorder %s15, 3
    %p104 = por %p102, %p103
    %p105 = scmp.ne.s32.totalorder %s94, %s95
    %p106 = scmp.eq.s32.totalorder %s15, 0
    %p107 = por %p105, %p106
    %p108 = scmp.ne.s32.totalorder %s94, %s95
    %p109 = scmp.eq.s32.totalorder %s16, 3
    %p110 = por %p108, %p109
    %p112 = scmp.ne.s32.totalorder %s95, %s111
    %p113 = scmp.eq.s32.totalorder %s16, 0
    %p114 = por %p112, %p113
    %s115 = ssub.s32 %s17, %s50
    %s116 = ssub.s32 %s18, %s46
    %s117 = sor.u32 %s115, %s116
    %s118 = ssub.s32 %s19, %s42
    %s119 = sor.u32 %s117, %s118
    %s120 = ssub.s32 %s21, %s34
    %s121 = sor.u32 %s119, %s120
    %p122 = scmp.eq.s32.totalorder %s121, 0
    %s124 = sadd.s32 %s123, 1
    %s125 = scalar_select %p122, %s123, %s124
    %p128 = pneg %p122
    %p129 = scmp.eq.s32.totalorder %s10, 3
    %p130 = por %p128, %p129
    %p131 = scmp.ne.s32.totalorder %s123, %s126
    %p132 = scmp.eq.s32.totalorder %s10, 0
    %p133 = por %p131, %p132
    %p134 = scmp.ne.s32.totalorder %s123, %s126
    %p135 = scmp.eq.s32.totalorder %s15, 3
    %p136 = por %p134, %p135
    %p137 = scmp.ne.s32.totalorder %s126, %s127
    %p138 = scmp.eq.s32.totalorder %s15, 0
    %p139 = por %p137, %p138
    %p140 = scmp.ne.s32.totalorder %s126, %s127
    %p141 = scmp.eq.s32.totalorder %s16, 3
    %p142 = por %p140, %p141
    %p144 = scmp.ne.s32.totalorder %s127, %s143
    %p145 = scmp.eq.s32.totalorder %s16, 0
    %p146 = por %p144, %p145
    %s147 = ssub.s32 %s18, %s46
    %s148 = ssub.s32 %s20, %s38
    %s149 = sor.u32 %s147, %s148
    %s150 = ssub.s32 %s21, %s34
    %s151 = sor.u32 %s149, %s150
    %p152 = scmp.eq.s32.totalorder %s151, 0
    %s154 = sadd.s32 %s153, 1
    %s155 = scalar_select %p152, %s153, %s154
    %p158 = pneg %p152
    %p159 = scmp.eq.s32.totalorder %s10, 3
    %p160 = por %p158, %p159
    %p161 = scmp.ne.s32.totalorder %s153, %s156
    %p162 = scmp.eq.s32.totalorder %s10, 0
    %p163 = por %p161, %p162
    %p164 = scmp.ne.s32.totalorder %s153, %s156
    %p165 = scmp.eq.s32.totalorder %s15, 3
    %p166 = por %p164, %p165
    %p167 = scmp.ne.s32.totalorder %s156, %s157
    %p168 = scmp.eq.s32.totalorder %s15, 0
    %p169 = por %p167, %p168
    %p170 = scmp.ne.s32.totalorder %s156, %s157
    %p171 = scmp.eq.s32.totalorder %s16, 3
    %p172 = por %p170, %p171
    %p174 = scmp.ne.s32.totalorder %s157, %s173
    %p175 = scmp.eq.s32.totalorder %s16, 0
    %p176 = por %p174, %p175
    %s177 = ssub.s32 %s17, %s50
    %s178 = ssub.s32 %s18, %s46
    %s179 = sor.u32 %s177, %s178
    %s180 = ssub.s32 %s19, %s42
    %s181 = sor.u32 %s179, %s180
    %s182 = ssub.s32 %s20, %s38
    %s183 = sor.u32 %s181, %s182
    %p184 = scmp.eq.s32.totalorder %s183, 0
    %s186 = sadd.s32 %s185, 1
    %s187 = scalar_select %p184, %s185, %s186
    %p190 = pneg %p184
    %p191 = scmp.eq.s32.totalorder %s10, 3
    %p192 = por %p190, %p191
    %p193 = scmp.ne.s32.totalorder %s185, %s188
    %p194 = scmp.eq.s32.totalorder %s10, 0
    %p195 = por %p193, %p194
    %p196 = scmp.ne.s32.totalorder %s185, %s188
    %p197 = scmp.eq.s32.totalorder %s15, 3
    %p198 = por %p196, %p197
    %p199 = scmp.ne.s32.totalorder %s188, %s189
    %p200 = scmp.eq.s32.totalorder %s15, 0
    %p201 = por %p199, %p200
    %p202 = scmp.ne.s32.totalorder %s188, %s189
    %p203 = scmp.eq.s32.totalorder %s16, 3
    %p204 = por %p202, %p203
    %p206 = scmp.ne.s32.totalorder %s189, %s205
    %p207 = scmp.eq.s32.totalorder %s16, 0
    %p208 = por %p206, %p207
    %p209 = scmp.le.s32.totalorder 1, %s10
    %p210 = scmp.lt.s32.totalorder %s10, 5
    %p211 = pnand %p209, %p210
    %p212 = pneg %p211
    // Predicated region
    $region9: #{_forward_impl.1} parent=5 // pred_check
      _
    $region10: #{_forward_impl.1} parent=5 // pred_check_branch
      %214 = sbr.rel (%p211) target = $region12
    $region11: #{_forward_impl.1} parent=5 // pred_region
      %s215 = ssub.s32 %s10, 1
    $region12: #{_forward_impl.1} parent=5 // pred_fallthru
      _
    %p216 = scmp.lt.s32.totalorder %s10, 4
    // Predicated region
    $region13: #{_forward_impl.1} parent=5 // pred_check
      %p217 = pneg %p216
    $region14: #{_forward_impl.1} parent=5 // pred_check_branch
      %219 = sbr.rel (%p217) target = $region16
    $region15: #{_forward_impl.1} parent=5 // pred_region
      // Predicated region
      $region17: #{_forward_impl.1} parent=15 // pred_check
        %p220 = pneg %p69
      $region18: #{_forward_impl.1} parent=15 // pred_check_branch
        %222 = sbr.rel (%p220) target = $region20
      $region19: #{_forward_impl.1} parent=15 // pred_region
        %s223 = smul.u32 2, %s19
        %s224 = smul.u32 2, %s20
        %p225 = scmp.lt.s32.totalorder %s17, 1
        %s226 = scalar_select %p225, %s17, 1
        %p227 = scmp.lt.s32.totalorder %s18, 1
        %s228 = scalar_select %p227, %s18, 1
        %p229 = scmp.lt.s32.totalorder %s223, 1
        %s230 = scalar_select %p229, %s223, 1
        %p231 = scmp.lt.s32.totalorder %s224, 1
        %s232 = scalar_select %p231, %s224, 1
        %s233 = smul.addr %s230, 2
        %s234 = sadd.s32 %s232, %s233
        %s235 = smul.addr %s228, 4
        %s236 = sadd.s32 %s234, %s235
        %s237 = smul.addr %s226, 8
        %s238 = sadd.s32 %s236, %s237
        %s239 = smul.addr %s238, 4
        %s240 = scalar_lea.vmem %s0, %s239
        %s241 = smul.u32 2, %s19
        %s242 = smul.u32 2, %s20
      $region20: #{_forward_impl.1} parent=15 // pred_fallthru
        _
      // Predicated region
      $region21: #{_forward_impl.1} parent=15 // pred_check
        %p243 = pneg %p101
      $region22: #{_forward_impl.1} parent=15 // pred_check_branch
        %245 = sbr.rel (%p243) target = $region24
      $region23: #{_forward_impl.1} parent=15 // pred_region
        %s246 = smul.u32 2, %s19
        %s247 = smul.u32 2, %s21
        %p248 = scmp.lt.s32.totalorder %s17, 1
        %s249 = scalar_select %p248, %s17, 1
        %p250 = scmp.lt.s32.totalorder %s18, 1
        %s251 = scalar_select %p250, %s18, 1
        %p252 = scmp.lt.s32.totalorder %s246, 1
        %s253 = scalar_select %p252, %s246, 1
        %p254 = scmp.lt.s32.totalorder %s247, 1
        %s255 = scalar_select %p254, %s247, 1
        %s256 = smul.addr %s253, 2
        %s257 = sadd.s32 %s255, %s256
        %s258 = smul.addr %s251, 4
        %s259 = sadd.s32 %s257, %s258
        %s260 = smul.addr %s249, 8
        %s261 = sadd.s32 %s259, %s260
        %s262 = smul.addr %s261, 4
        %s263 = scalar_lea.vmem %s1, %s262
        %s264 = smul.u32 2, %s19
        %s265 = smul.u32 2, %s21
      $region24: #{_forward_impl.1} parent=15 // pred_fallthru
        _
      // Predicated region
      $region25: #{_forward_impl.1} parent=15 // pred_check
        %p266 = pneg %p133
      $region26: #{_forward_impl.1} parent=15 // pred_check_branch
        %268 = sbr.rel (%p266) target = $region28
      $region27: #{_forward_impl.1} parent=15 // pred_region
        %s269 = smul.u32 2, %s19
        %s270 = smul.u32 2, %s21
        %p271 = scmp.lt.s32.totalorder %s17, 1
        %s272 = scalar_select %p271, %s17, 1
        %p273 = scmp.lt.s32.totalorder %s18, 1
        %s274 = scalar_select %p273, %s18, 1
        %p275 = scmp.lt.s32.totalorder %s269, 1
        %s276 = scalar_select %p275, %s269, 1
        %p277 = scmp.lt.s32.totalorder %s270, 1
        %s278 = scalar_select %p277, %s270, 1
        %s279 = smul.addr %s276, 2
        %s280 = sadd.s32 %s278, %s279
        %s281 = smul.addr %s274, 4
        %s282 = sadd.s32 %s280, %s281
        %s283 = smul.addr %s272, 8
        %s284 = sadd.s32 %s282, %s283
        %s285 = smul.addr %s284, 4
        %s286 = scalar_lea.vmem %s2, %s285
        %s287 = smul.u32 2, %s19
        %s288 = smul.u32 2, %s21
      $region28: #{_forward_impl.1} parent=15 // pred_fallthru
        _
      // Predicated region
      $region29: #{_forward_impl.1} parent=15 // pred_check
        %p289 = pneg %p163
      $region30: #{_forward_impl.1} parent=15 // pred_check_branch
        %291 = sbr.rel (%p289) target = $region32
      $region31: #{_forward_impl.1} parent=15 // pred_region
        %s292 = smul.u32 2, %s20
        %p293 = scmp.lt.s32.totalorder %s18, 1
        %s294 = scalar_select %p293, %s18, 1
        %p295 = scmp.lt.s32.totalorder %s292, 1
        %s296 = scalar_select %p295, %s292, 1
        %p297 = scmp.lt.s32.totalorder %s21, 0
        %s298 = scalar_select %p297, %s21, 0
        %s299 = sadd.s32 %s298, %s296
        %s300 = smul.addr %s294, 2
        %s301 = sadd.s32 %s299, %s300
        %s302 = smul.addr %s301, 4
        %s303 = scalar_lea.vmem %s3, %s302
        %s304 = smul.u32 2, %s20
      $region32: #{_forward_impl.1} parent=15 // pred_fallthru
        _
    $region16: #{_forward_impl.1} parent=5 // pred_fallthru
      _
    %p305 = scmp.le.s32.totalorder 1, %s10
    %p306 = scmp.lt.s32.totalorder %s10, 5
    %p307 = pnand %p305, %p306
    %p308 = pneg %p307
    // Predicated region
    $region33: #{_forward_impl.1} parent=5 // pred_check
      _
    $region34: #{_forward_impl.1} parent=5 // pred_check_branch
      %310 = sbr.rel (%p307) target = $region36
    $region35: #{_forward_impl.1} parent=5 // pred_region
      %s311 = ssub.s32 %s10, 1
      %s312 = smul.u32 2, %s24
      %s313 = smul.u32 2, %s25
      %p314 = scmp.lt.s32.totalorder %s22, 1
      %s315 = scalar_select %p314, %s22, 1
      %p316 = scmp.lt.s32.totalorder %s23, 1
      %s317 = scalar_select %p316, %s23, 1
      %p318 = scmp.lt.s32.totalorder %s312, 1
      %s319 = scalar_select %p318, %s312, 1
      %p320 = scmp.lt.s32.totalorder %s313, 1
      %s321 = scalar_select %p320, %s313, 1
      %s322 = smul.addr %s319, 2
      %s323 = sadd.s32 %s321, %s322
      %s324 = smul.addr %s317, 4
      %s325 = sadd.s32 %s323, %s324
      %s326 = smul.addr %s315, 8
      %s327 = sadd.s32 %s325, %s326
      %s328 = smul.addr %s327, 4
      %s329 = scalar_lea.vmem %s0, %s328
      %p330 = pneg %p75
      %p331 = pneg %p72
      %s332 = smul.u32 2, %s24
      %s333 = smul.u32 2, %s26
      %p334 = scmp.lt.s32.totalorder %s22, 1
      %s335 = scalar_select %p334, %s22, 1
      %p336 = scmp.lt.s32.totalorder %s23, 1
      %s337 = scalar_select %p336, %s23, 1
      %p338 = scmp.lt.s32.totalorder %s332, 1
      %s339 = scalar_select %p338, %s332, 1
      %p340 = scmp.lt.s32.totalorder %s333, 1
      %s341 = scalar_select %p340, %s333, 1
      %s342 = smul.addr %s339, 2
      %s343 = sadd.s32 %s341, %s342
      %s344 = smul.addr %s337, 4
      %s345 = sadd.s32 %s343, %s344
      %s346 = smul.addr %s335, 8
      %s347 = sadd.s32 %s345, %s346
      %s348 = smul.addr %s347, 4
      %s349 = scalar_lea.vmem %s1, %s348
      %p350 = pneg %p107
      %p351 = pneg %p104
      %s352 = smul.u32 2, %s24
      %s353 = smul.u32 2, %s26
      %p354 = scmp.lt.s32.totalorder %s22, 1
      %s355 = scalar_select %p354, %s22, 1
      %p356 = scmp.lt.s32.totalorder %s23, 1
      %s357 = scalar_select %p356, %s23, 1
      %p358 = scmp.lt.s32.totalorder %s352, 1
      %s359 = scalar_select %p358, %s352, 1
      %p360 = scmp.lt.s32.totalorder %s353, 1
      %s361 = scalar_select %p360, %s353, 1
      %s362 = smul.addr %s359, 2
      %s363 = sadd.s32 %s361, %s362
      %s364 = smul.addr %s357, 4
      %s365 = sadd.s32 %s363, %s364
      %s366 = smul.addr %s355, 8
      %s367 = sadd.s32 %s365, %s366
      %s368 = smul.addr %s367, 4
      %s369 = scalar_lea.vmem %s2, %s368
      %p370 = pneg %p139
      %p371 = pneg %p136
      %s372 = smul.u32 2, %s25
      %p373 = scmp.lt.s32.totalorder %s23, 1
      %s374 = scalar_select %p373, %s23, 1
      %p375 = scmp.lt.s32.totalorder %s372, 1
      %s376 = scalar_select %p375, %s372, 1
      %p377 = scmp.lt.s32.totalorder %s26, 0
      %s378 = scalar_select %p377, %s26, 0
      %s379 = sadd.s32 %s378, %s376
      %s380 = smul.addr %s374, 2
      %s381 = sadd.s32 %s379, %s380
      %s382 = smul.addr %s381, 4
      %s383 = scalar_lea.vmem %s3, %s382
      %p384 = pneg %p169
      %p385 = pneg %p166
      %p386 = pneg %p201
      %p387 = pneg %p198
      %s388 = smul.u32 2, %s24
      %s389 = smul.u32 2, %s25
      %p390 = scmp.lt.s32.totalorder %s22, 1
      %s391 = scalar_select %p390, %s22, 1
      %p392 = scmp.lt.s32.totalorder %s23, 1
      %s393 = scalar_select %p392, %s23, 1
      %p394 = scmp.lt.s32.totalorder %s388, 1
      %s395 = scalar_select %p394, %s388, 1
      %p396 = scmp.lt.s32.totalorder %s389, 1
      %s397 = scalar_select %p396, %s389, 1
      %s398 = smul.addr %s395, 2
      %s399 = sadd.s32 %s397, %s398
      %s400 = smul.addr %s393, 4
      %s401 = sadd.s32 %s399, %s400
      %s402 = smul.addr %s391, 8
      %s403 = sadd.s32 %s401, %s402
      %s404 = smul.addr %s403, 8
      %s405 = scalar_lea.vmem %s4, %s404
      %s406 = smul.u32 2, %s24
      %s407 = smul.u32 2, %s25
      %p408 = scmp.lt.s32.totalorder %s22, 1
      %s409 = scalar_select %p408, %s22, 1
      %p410 = scmp.lt.s32.totalorder %s23, 1
      %s411 = scalar_select %p410, %s23, 1
      %p412 = scmp.lt.s32.totalorder %s406, 1
      %s413 = scalar_select %p412, %s406, 1
      %p414 = scmp.lt.s32.totalorder %s407, 1
      %s415 = scalar_select %p414, %s407, 1
      %s416 = smul.addr %s413, 2
      %s417 = sadd.s32 %s415, %s416
      %s418 = smul.addr %s411, 4
      %s419 = sadd.s32 %s417, %s418
      %s420 = smul.addr %s409, 8
      %s421 = sadd.s32 %s419, %s420
      %s422 = smul.addr %s421, 4
      %s423 = scalar_lea.vmem %s0, %s422
      %s424 = smul.u32 2, %s24
      %s425 = smul.u32 2, %s25
      %s426 = smul.u32 2, %s24
      %s427 = smul.u32 2, %s26
      %p428 = scmp.lt.s32.totalorder %s22, 1
      %s429 = scalar_select %p428, %s22, 1
      %p430 = scmp.lt.s32.totalorder %s23, 1
      %s431 = scalar_select %p430, %s23, 1
      %p432 = scmp.lt.s32.totalorder %s426, 1
      %s433 = scalar_select %p432, %s426, 1
      %p434 = scmp.lt.s32.totalorder %s427, 1
      %s435 = scalar_select %p434, %s427, 1
      %s436 = smul.addr %s433, 2
      %s437 = sadd.s32 %s435, %s436
      %s438 = smul.addr %s431, 4
      %s439 = sadd.s32 %s437, %s438
      %s440 = smul.addr %s429, 8
      %s441 = sadd.s32 %s439, %s440
      %s442 = smul.addr %s441, 4
      %s443 = scalar_lea.vmem %s1, %s442
      %s444 = smul.u32 2, %s24
      %s445 = smul.u32 2, %s26
      %s446 = smul.u32 2, %s24
      %s447 = smul.u32 2, %s26
      %p448 = scmp.lt.s32.totalorder %s22, 1
      %s449 = scalar_select %p448, %s22, 1
      %p450 = scmp.lt.s32.totalorder %s23, 1
      %s451 = scalar_select %p450, %s23, 1
      %p452 = scmp.lt.s32.totalorder %s446, 1
      %s453 = scalar_select %p452, %s446, 1
      %p454 = scmp.lt.s32.totalorder %s447, 1
      %s455 = scalar_select %p454, %s447, 1
      %s456 = smul.addr %s453, 2
      %s457 = sadd.s32 %s455, %s456
      %s458 = smul.addr %s451, 4
      %s459 = sadd.s32 %s457, %s458
      %s460 = smul.addr %s449, 8
      %s461 = sadd.s32 %s459, %s460
      %s462 = smul.addr %s461, 4
      %s463 = scalar_lea.vmem %s2, %s462
      %s464 = smul.u32 2, %s24
      %s465 = smul.u32 2, %s26
      %s466 = smul.u32 2, %s25
      %p467 = scmp.lt.s32.totalorder %s23, 1
      %s468 = scalar_select %p467, %s23, 1
      %p469 = scmp.lt.s32.totalorder %s466, 1
      %s470 = scalar_select %p469, %s466, 1
      %p471 = scmp.lt.s32.totalorder %s26, 0
      %s472 = scalar_select %p471, %s26, 0
      %s473 = sadd.s32 %s472, %s470
      %s474 = smul.addr %s468, 2
      %s475 = sadd.s32 %s473, %s474
      %s476 = smul.addr %s475, 4
      %s477 = scalar_lea.vmem %s3, %s476
      %s478 = smul.u32 2, %s25
      %s479 = smul.u32 2, %s24
      %s480 = smul.u32 2, %s25
      %p481 = scmp.lt.s32.totalorder %s22, 1
      %s482 = scalar_select %p481, %s22, 1
      %p483 = scmp.lt.s32.totalorder %s23, 1
      %s484 = scalar_select %p483, %s23, 1
      %p485 = scmp.lt.s32.totalorder %s479, 1
      %s486 = scalar_select %p485, %s479, 1
      %p487 = scmp.lt.s32.totalorder %s480, 1
      %s488 = scalar_select %p487, %s480, 1
      %s489 = smul.addr %s486, 2
      %s490 = sadd.s32 %s488, %s489
      %s491 = smul.addr %s484, 4
      %s492 = sadd.s32 %s490, %s491
      %s493 = smul.addr %s482, 8
      %s494 = sadd.s32 %s492, %s493
      %s495 = smul.addr %s494, 8
      %s496 = scalar_lea.vmem %s4, %s495
      %s497 = smul.u32 2, %s24
      %s498 = smul.u32 2, %s25
      %p501 = scmp.eq.s32.totalorder %s26, 0
      // Predicated region
      $region37: #{_forward_impl.1} parent=35 // pred_check
        %p502 = pneg %p501
      $region38: #{_forward_impl.1} parent=35 // pred_check_branch
        %504 = sbr.rel (%p502) target = $region40
      $region39: #{_forward_impl.1} parent=35 // pred_region
        %vm505 = vcmask 7168
        %506 = vst.msk [vmem:[#allocation2] sm:$0xff] %vm505, -2.3819763e+38
        %507 = vst.msk [vmem:[#allocation2 + $0x8] sm:$0xff] %vm505, -2.3819763e+38
        %508 = vst.msk [vmem:[#allocation2 + $0x10] sm:$0xff] %vm505, -2.3819763e+38
        %509 = vst.msk [vmem:[#allocation2 + $0x18] sm:$0xff] %vm505, -2.3819763e+38
        %510 = vst.msk [vmem:[#allocation3] sm:$0xff] %vm505, 0.0
        %511 = vst.msk [vmem:[#allocation3 + $0x8] sm:$0xff] %vm505, 0.0
        %512 = vst.msk [vmem:[#allocation3 + $0x10] sm:$0xff] %vm505, 0.0
        %513 = vst.msk [vmem:[#allocation3 + $0x18] sm:$0xff] %vm505, 0.0
        %vm514 = vcmask 261120
        %515 = vst.msk [vmem:[#allocation4] sm:$0xff] %vm514, 0.0
        %516 = vst.msk [vmem:[#allocation4 + $0x8] sm:$0xff] %vm514, 0.0
        %517 = vst.msk [vmem:[#allocation4 + $0x10] sm:$0xff] %vm514, 0.0
        %518 = vst.msk [vmem:[#allocation4 + $0x18] sm:$0xff] %vm514, 0.0
      $region40: #{_forward_impl.1} parent=35 // pred_fallthru
        _
      %v519 = vld [vmem:[%s423] sm:$0xf]
      %v520 = vld [vmem:[%s423 + $0x4] sm:$0xf]
      %v521 = vld [vmem:[%s423 + $0x8] sm:$0xf]
      %v522 = vld [vmem:[%s423 + $0xc] sm:$0xf]
      %v523 = vmul.bf16 %v519, 1043676725
      %v524 = vmul.bf16 %v520, 1043676725
      %v525 = vmul.bf16 %v521, 1043676725
      %v526 = vmul.bf16 %v522, 1043676725
      %v527 = vld [vmem:[%s443] sm:$0xf]
      %v528 = vld [vmem:[%s443 + $0x4] sm:$0xf]
      %v529 = vld [vmem:[%s443 + $0x8] sm:$0xf]
      %v530 = vld [vmem:[%s443 + $0xc] sm:$0xf]
      %v531 = vld [vmem:[%s463] sm:$0xf]
      %v532 = vld [vmem:[%s463 + $0x4] sm:$0xf]
      %v533 = vld [vmem:[%s463 + $0x8] sm:$0xf]
      %v534 = vld [vmem:[%s463 + $0xc] sm:$0xf]
      %v535 = vld [vmem:[%s477] sm:$0xf]
      %v536 = vld [vmem:[%s477 + $0x4] sm:$0xf]
      %v537 = vunpack.c.l.bf16 %v535
      %v538 = vunpack.c.l.bf16 %v536
      %v541 = vunpack.c.l.b16 %v523
      %v542 = vunpack.c.l.b16 %v524
      %v543 = vpack.c.b16 %v542, %v541
      %v546 = vunpack.c.l.b16 %v527
      %v547 = vunpack.c.l.b16 %v528
      %v548 = vpack.c.b16 %v547, %v546
      %vm549 = vcmask 261120
      %v551 = vsel %vm549, %v543, 0
      %v554 = vsel %vm549, %v548, 0
      %556 = vmatprep.subr.bf16.mxu0 0
      %557 = vmatpush1.bf16.xpose.msra.mxu0 %v554
      %558 = vmatprep.subr.bf16.mxu0 0
      %559 = vmatpush1.bf16.xpose.msra.mxu0 0
      %560 = vmatprep.subr.bf16.mxu0 0
      %561 = vmatpush1.bf16.xpose.msra.mxu0 0
      %562 = vmatprep.subr.bf16.mxu0 0
      %563 = vmatpush1.bf16.xpose.msra.mxu0 0
      %564 = vmatprep.subr.bf16.mxu0 0
      %565 = vmatpush1.bf16.xpose.msra.mxu0 0
      %566 = vmatprep.subr.bf16.mxu0 0
      %567 = vmatpush1.bf16.xpose.msra.mxu0 0
      %568 = vmatprep.subr.bf16.mxu0 0
      %569 = vmatpush1.bf16.xpose.msra.mxu0 0
      %570 = vmatprep.subr.bf16.mxu0 0
      %571 = vmatpush1.bf16.xpose.msra.mxu0 0
      %572 = vmatprep.subr.bf16.mxu0 0
      %573 = vmatpush1.bf16.xpose.msra.mxu0 0
      %574 = vmatprep.subr.bf16.mxu0 0
      %575 = vmatpush1.bf16.xpose.msra.mxu0 0
      %576 = vmatprep.subr.bf16.mxu0 0
      %577 = vmatpush1.bf16.xpose.msra.mxu0 0
      %578 = vmatprep.subr.bf16.mxu0 0
      %579 = vmatpush1.bf16.xpose.msra.mxu0 0
      %580 = vmatprep.subr.bf16.mxu0 0
      %581 = vmatpush1.bf16.xpose.msra.mxu0 0
      %582 = vmatprep.subr.bf16.mxu0 0
      %583 = vmatpush1.bf16.xpose.msra.mxu0 0
      %584 = vmatprep.subr.bf16.mxu0 0
      %585 = vmatpush1.bf16.xpose.msra.mxu0 0
      %586 = vmatprep.subr.bf16.mxu0 0
      %587 = vmatpush1.bf16.xpose.msra.mxu0 0
      %588 = vmatprep.mubr.bf16.mxu0 0
      %589 = vmatmul.mubr.bf16.gmra.mrb[0].mxu0 %v551
      %v590 = vpop.f32.mrb[0].mxu0
      %v591 = vadd.f32 %v537, %v590
      %v592 = vpop.f32.mrb[0].mxu0
      %v593 = vpop.f32.mrb[0].mxu0
      %v594 = vadd.f32 %v538, %v593
      %v595 = vpop.f32.mrb[0].mxu0
      %596 = vdwg.mxu0
      %v599 = vunpack.c.l.b16 %v525
      %v600 = vunpack.c.l.b16 %v526
      %v601 = vpack.c.b16 %v600, %v599
      %v604 = vunpack.c.l.b16 %v529
      %v605 = vunpack.c.l.b16 %v530
      %v606 = vpack.c.b16 %v605, %v604
      %v608 = vsel %vm549, %v601, 0
      %v611 = vsel %vm549, %v606, 0
      %613 = vmatprep.subr.bf16.mxu0 0
      %614 = vmatpush1.bf16.xpose.msra.mxu0 %v611
      %615 = vmatprep.subr.bf16.mxu0 0
      %616 = vmatpush1.bf16.xpose.msra.mxu0 0
      %617 = vmatprep.subr.bf16.mxu0 0
      %618 = vmatpush1.bf16.xpose.msra.mxu0 0
      %619 = vmatprep.subr.bf16.mxu0 0
      %620 = vmatpush1.bf16.xpose.msra.mxu0 0
      %621 = vmatprep.subr.bf16.mxu0 0
      %622 = vmatpush1.bf16.xpose.msra.mxu0 0
      %623 = vmatprep.subr.bf16.mxu0 0
      %624 = vmatpush1.bf16.xpose.msra.mxu0 0
      %625 = vmatprep.subr.bf16.mxu0 0
      %626 = vmatpush1.bf16.xpose.msra.mxu0 0
      %627 = vmatprep.subr.bf16.mxu0 0
      %628 = vmatpush1.bf16.xpose.msra.mxu0 0
      %629 = vmatprep.subr.bf16.mxu0 0
      %630 = vmatpush1.bf16.xpose.msra.mxu0 0
      %631 = vmatprep.subr.bf16.mxu0 0
      %632 = vmatpush1.bf16.xpose.msra.mxu0 0
      %633 = vmatprep.subr.bf16.mxu0 0
      %634 = vmatpush1.bf16.xpose.msra.mxu0 0
      %635 = vmatprep.subr.bf16.mxu0 0
      %636 = vmatpush1.bf16.xpose.msra.mxu0 0
      %637 = vmatprep.subr.bf16.mxu0 0
      %638 = vmatpush1.bf16.xpose.msra.mxu0 0
      %639 = vmatprep.subr.bf16.mxu0 0
      %640 = vmatpush1.bf16.xpose.msra.mxu0 0
      %641 = vmatprep.subr.bf16.mxu0 0
      %642 = vmatpush1.bf16.xpose.msra.mxu0 0
      %643 = vmatprep.subr.bf16.mxu0 0
      %644 = vmatpush1.bf16.xpose.msra.mxu0 0
      %645 = vmatprep.mubr.bf16.mxu0 0
      %646 = vmatmul.mubr.bf16.gmra.mrb[0].mxu0 %v608
      %v647 = vpop.f32.mrb[0].mxu0
      %v648 = vadd.f32 %v537, %v647
      %v649 = vpop.f32.mrb[0].mxu0
      %v650 = vpop.f32.mrb[0].mxu0
      %v651 = vadd.f32 %v538, %v650
      %v652 = vpop.f32.mrb[0].mxu0
      %653 = vdwg.mxu0
      %v654 = vld [vmem:[#allocation2] sm:$0xff]
      %v655 = vld [vmem:[#allocation2 + $0x8] sm:$0xff]
      %v656 = vld [vmem:[#allocation2 + $0x10] sm:$0xff]
      %v657 = vld [vmem:[#allocation2 + $0x18] sm:$0xff]
      %vm658 = vcmask 130048
      %v659 = vsel %vm658, %v591, -inf
      %660 = vmax.xlane.f32.xlu0 %v659
      %v661 = vpop.xlane.xlu0 %660
      %v662 = vsel %vm658, %v594, -inf
      %663 = vmax.xlane.f32.xlu0 %v662
      %v664 = vpop.xlane.xlu0 %663
      %v665 = vsel %vm658, %v648, -inf
      %666 = vmax.xlane.f32.xlu0 %v665
      %v667 = vpop.xlane.xlu0 %666
      %v668 = vsel %vm658, %v651, -inf
      %669 = vmax.xlane.f32.xlu0 %v668
      %v670 = vpop.xlane.xlu0 %669
      %v671 = vmax.f32 %v654, %v661
      %v672 = vmax.f32 %v655, %v664
      %v673 = vmax.f32 %v656, %v667
      %v674 = vmax.f32 %v657, %v670
      %v675 = vsub.f32 %v654, %v671
      %v676 = vsub.f32 %v655, %v672
      %v677 = vsub.f32 %v656, %v673
      %v678 = vsub.f32 %v657, %v674
      %v679 = vmul.f32 %v675, 1.442695
      %v680 = vpow.pop %v679
      %v681 = vmul.f32 %v676, 1.442695
      %v682 = vpow.pop %v681
      %v683 = vmul.f32 %v677, 1.442695
      %v684 = vpow.pop %v683
      %v685 = vmul.f32 %v678, 1.442695
      %v686 = vpow.pop %v685
      %688 = vset.pattern.permute.xlu0 0
      %689 = vperm.xlu0 %688, %v671
      %v690 = vpop.permute.xlu0 %689
      %693 = vset.pattern.permute.xlu0 0
      %694 = vperm.xlu0 %693, %v672
      %v695 = vpop.permute.xlu0 %694
      %698 = vset.pattern.permute.xlu0 0
      %699 = vperm.xlu0 %698, %v673
      %v700 = vpop.permute.xlu0 %699
      %703 = vset.pattern.permute.xlu0 0
      %704 = vperm.xlu0 %703, %v674
      %v705 = vpop.permute.xlu0 %704
      %v707 = vsub.f32 %v591, %v690
      %v708 = vsub.f32 %v594, %v695
      %v709 = vsub.f32 %v648, %v700
      %v710 = vsub.f32 %v651, %v705
      %v711 = vmul.f32 %v707, 1.442695
      %v712 = vpow.pop %v711
      %v713 = vmul.f32 %v708, 1.442695
      %v714 = vpow.pop %v713
      %v715 = vmul.f32 %v709, 1.442695
      %v716 = vpow.pop %v715
      %v717 = vmul.f32 %v710, 1.442695
      %v718 = vpow.pop %v717
      %v719 = vld [vmem:[#allocation3] sm:$0xff]
      %v720 = vld [vmem:[#allocation3 + $0x8] sm:$0xff]
      %v721 = vld [vmem:[#allocation3 + $0x10] sm:$0xff]
      %v722 = vld [vmem:[#allocation3 + $0x18] sm:$0xff]
      %v723 = vmul.f32 %v680, %v719
      %v724 = vmul.f32 %v682, %v720
      %v725 = vmul.f32 %v684, %v721
      %v726 = vmul.f32 %v686, %v722
      %v727 = vsel %vm658, %v712, 0.0
      %728 = vadd.xlane.f32.xlu0 %v727
      %v729 = vpop.xlane.xlu0 %728
      %v730 = vsel %vm658, %v714, 0.0
      %731 = vadd.xlane.f32.xlu0 %v730
      %v732 = vpop.xlane.xlu0 %731
      %v733 = vsel %vm658, %v716, 0.0
      %734 = vadd.xlane.f32.xlu0 %v733
      %v735 = vpop.xlane.xlu0 %734
      %v736 = vsel %vm658, %v718, 0.0
      %737 = vadd.xlane.f32.xlu0 %v736
      %v738 = vpop.xlane.xlu0 %737
      %v739 = vadd.f32 %v723, %v729
      %v740 = vadd.f32 %v724, %v732
      %v741 = vadd.f32 %v725, %v735
      %v742 = vadd.f32 %v726, %v738
      %vm743 = vcmask 7168
      %744 = vst.msk [vmem:[#allocation3] sm:$0xff] %vm743, %v739
      %745 = vst.msk [vmem:[#allocation3 + $0x8] sm:$0xff] %vm743, %v740
      %746 = vst.msk [vmem:[#allocation3 + $0x10] sm:$0xff] %vm743, %v741
      %747 = vst.msk [vmem:[#allocation3 + $0x18] sm:$0xff] %vm743, %v742
      %v748 = vld [vmem:[#allocation4] sm:$0xff]
      %v749 = vld [vmem:[#allocation4 + $0x8] sm:$0xff]
      %v750 = vld [vmem:[#allocation4 + $0x10] sm:$0xff]
      %v751 = vld [vmem:[#allocation4 + $0x18] sm:$0xff]
      %753 = vset.pattern.permute.xlu0 0
      %754 = vperm.xlu0 %753, %v680
      %v755 = vpop.permute.xlu0 %754
      %758 = vset.pattern.permute.xlu0 0
      %759 = vperm.xlu0 %758, %v682
      %v760 = vpop.permute.xlu0 %759
      %763 = vset.pattern.permute.xlu0 0
      %764 = vperm.xlu0 %763, %v684
      %v765 = vpop.permute.xlu0 %764
      %768 = vset.pattern.permute.xlu0 0
      %769 = vperm.xlu0 %768, %v686
      %v770 = vpop.permute.xlu0 %769
      %v772 = vmul.f32 %v755, %v748
      %v773 = vmul.f32 %v760, %v749
      %v774 = vmul.f32 %v765, %v750
      %v775 = vmul.f32 %v770, %v751
      %v776 = vpack.c.bf16 %v714, %v712
      %v777 = vpack.c.bf16 %v718, %v716
      %v780 = vunpack.c.l.b16 %v531
      %v781 = vunpack.c.l.b16 %v532
      %v782 = vpack.c.b16 %v781, %v780
      %v785 = vsel %vm658, %v776, 0
      %787 = vmatprep.subr.bf16.mxu0 0
      %788 = vmatpush1.bf16.msra.mxu0 %v782
      %789 = vmatprep.subr.bf16.mxu0 0
      %790 = vmatpush1.bf16.msra.mxu0 0
      %791 = vmatprep.subr.bf16.mxu0 0
      %792 = vmatpush1.bf16.msra.mxu0 0
      %793 = vmatprep.subr.bf16.mxu0 0
      %794 = vmatpush1.bf16.msra.mxu0 0
      %795 = vmatprep.subr.bf16.mxu0 0
      %796 = vmatpush1.bf16.msra.mxu0 0
      %797 = vmatprep.subr.bf16.mxu0 0
      %798 = vmatpush1.bf16.msra.mxu0 0
      %799 = vmatprep.subr.bf16.mxu0 0
      %800 = vmatpush1.bf16.msra.mxu0 0
      %801 = vmatprep.subr.bf16.mxu0 0
      %802 = vmatpush1.bf16.msra.mxu0 0
      %803 = vmatprep.subr.bf16.mxu0 0
      %804 = vmatpush1.bf16.msra.mxu0 0
      %805 = vmatprep.subr.bf16.mxu0 0
      %806 = vmatpush1.bf16.msra.mxu0 0
      %807 = vmatprep.subr.bf16.mxu0 0
      %808 = vmatpush1.bf16.msra.mxu0 0
      %809 = vmatprep.subr.bf16.mxu0 0
      %810 = vmatpush1.bf16.msra.mxu0 0
      %811 = vmatprep.subr.bf16.mxu0 0
      %812 = vmatpush1.bf16.msra.mxu0 0
      %813 = vmatprep.subr.bf16.mxu0 0
      %814 = vmatpush1.bf16.msra.mxu0 0
      %815 = vmatprep.subr.bf16.mxu0 0
      %816 = vmatpush1.bf16.msra.mxu0 0
      %817 = vmatprep.subr.bf16.mxu0 0
      %818 = vmatpush1.bf16.msra.mxu0 0
      %819 = vmatprep.mubr.bf16.mxu0 0
      %820 = vmatmul.mubr.bf16.gmra.mrb[0].mxu0 %v785
      %v821 = vpop.f32.mrb[0].mxu0
      %v822 = vadd.f32 0.0, %v821
      %v823 = vpop.f32.mrb[0].mxu0
      %v824 = vpop.f32.mrb[0].mxu0
      %v825 = vadd.f32 0.0, %v824
      %v826 = vpop.f32.mrb[0].mxu0
      %827 = vdwg.mxu0
      %v830 = vunpack.c.l.b16 %v533
      %v831 = vunpack.c.l.b16 %v534
      %v832 = vpack.c.b16 %v831, %v830
      %v835 = vsel %vm658, %v777, 0
      %837 = vmatprep.subr.bf16.mxu0 0
      %838 = vmatpush1.bf16.msra.mxu0 %v832
      %839 = vmatprep.subr.bf16.mxu0 0
      %840 = vmatpush1.bf16.msra.mxu0 0
      %841 = vmatprep.subr.bf16.mxu0 0
      %842 = vmatpush1.bf16.msra.mxu0 0
      %843 = vmatprep.subr.bf16.mxu0 0
      %844 = vmatpush1.bf16.msra.mxu0 0
      %845 = vmatprep.subr.bf16.mxu0 0
      %846 = vmatpush1.bf16.msra.mxu0 0
      %847 = vmatprep.subr.bf16.mxu0 0
      %848 = vmatpush1.bf16.msra.mxu0 0
      %849 = vmatprep.subr.bf16.mxu0 0
      %850 = vmatpush1.bf16.msra.mxu0 0
      %851 = vmatprep.subr.bf16.mxu0 0
      %852 = vmatpush1.bf16.msra.mxu0 0
      %853 = vmatprep.subr.bf16.mxu0 0
      %854 = vmatpush1.bf16.msra.mxu0 0
      %855 = vmatprep.subr.bf16.mxu0 0
      %856 = vmatpush1.bf16.msra.mxu0 0
      %857 = vmatprep.subr.bf16.mxu0 0
      %858 = vmatpush1.bf16.msra.mxu0 0
      %859 = vmatprep.subr.bf16.mxu0 0
      %860 = vmatpush1.bf16.msra.mxu0 0
      %861 = vmatprep.subr.bf16.mxu0 0
      %862 = vmatpush1.bf16.msra.mxu0 0
      %863 = vmatprep.subr.bf16.mxu0 0
      %864 = vmatpush1.bf16.msra.mxu0 0
      %865 = vmatprep.subr.bf16.mxu0 0
      %866 = vmatpush1.bf16.msra.mxu0 0
      %867 = vmatprep.subr.bf16.mxu0 0
      %868 = vmatpush1.bf16.msra.mxu0 0
      %869 = vmatprep.mubr.bf16.mxu0 0
      %870 = vmatmul.mubr.bf16.gmra.mrb[0].mxu0 %v835
      %v871 = vpop.f32.mrb[0].mxu0
      %v872 = vadd.f32 0.0, %v871
      %v873 = vpop.f32.mrb[0].mxu0
      %v874 = vpop.f32.mrb[0].mxu0
      %v875 = vadd.f32 0.0, %v874
      %v876 = vpop.f32.mrb[0].mxu0
      %877 = vdwg.mxu0
      %v878 = vadd.f32 %v772, %v822
      %v879 = vadd.f32 %v773, %v825
      %v880 = vadd.f32 %v774, %v872
      %v881 = vadd.f32 %v775, %v875
      %882 = vst.msk [vmem:[#allocation4] sm:$0xff] %vm549, %v878
      %883 = vst.msk [vmem:[#allocation4 + $0x8] sm:$0xff] %vm549, %v879
      %884 = vst.msk [vmem:[#allocation4 + $0x10] sm:$0xff] %vm549, %v880
      %885 = vst.msk [vmem:[#allocation4 + $0x18] sm:$0xff] %vm549, %v881
      %886 = vst.msk [vmem:[#allocation2] sm:$0xff] %vm743, %v671
      %887 = vst.msk [vmem:[#allocation2 + $0x8] sm:$0xff] %vm743, %v672
      %888 = vst.msk [vmem:[#allocation2 + $0x10] sm:$0xff] %vm743, %v673
      %889 = vst.msk [vmem:[#allocation2 + $0x18] sm:$0xff] %vm743, %v674
      // Predicated region
      $region41: #{_forward_impl.1} parent=35 // pred_check
        %p890 = pneg %p501
      $region42: #{_forward_impl.1} parent=35 // pred_check_branch
        %892 = sbr.rel (%p890) target = $region44
      $region43: #{_forward_impl.1} parent=35 // pred_region
        %v893 = vld [vmem:[#allocation3] sm:$0xff]
        %v894 = vld [vmem:[#allocation3 + $0x8] sm:$0xff]
        %v895 = vld [vmem:[#allocation3 + $0x10] sm:$0xff]
        %v896 = vld [vmem:[#allocation3 + $0x18] sm:$0xff]
        %vm897 = vcmp.gt.f32.partialorder %v893, 0.0
        %vm898 = vcmp.gt.f32.partialorder %v894, 0.0
        %vm899 = vcmp.gt.f32.partialorder %v895, 0.0
        %vm900 = vcmp.gt.f32.partialorder %v896, 0.0
        %v901 = vsel %vm897, %v893, 1.0
        %v902 = vsel %vm898, %v894, 1.0
        %v903 = vsel %vm899, %v895, 1.0
        %v904 = vsel %vm900, %v896, 1.0
        %v905 = vrcp.pop %v901
        %v906 = vrcp.pop %v902
        %v907 = vrcp.pop %v903
        %v908 = vrcp.pop %v904
        %v909 = vmul.f32 %v901, %v905
        %v910 = vmul.f32 %v902, %v906
        %v911 = vmul.f32 %v903, %v907
        %v912 = vmul.f32 %v904, %v908
        %v913 = vsub.f32 2.0, %v909
        %v914 = vsub.f32 2.0, %v910
        %v915 = vsub.f32 2.0, %v911
        %v916 = vsub.f32 2.0, %v912
        %v917 = vmul.f32 %v905, %v913
        %v918 = vmul.f32 %v906, %v914
        %v919 = vmul.f32 %v907, %v915
        %v920 = vmul.f32 %v908, %v916
        %v921 = vld [vmem:[#allocation4] sm:$0xff]
        %v922 = vld [vmem:[#allocation4 + $0x8] sm:$0xff]
        %v923 = vld [vmem:[#allocation4 + $0x10] sm:$0xff]
        %v924 = vld [vmem:[#allocation4 + $0x18] sm:$0xff]
        %926 = vset.pattern.permute.xlu0 0
        %927 = vperm.xlu0 %926, %v917
        %v928 = vpop.permute.xlu0 %927
        %931 = vset.pattern.permute.xlu0 0
        %932 = vperm.xlu0 %931, %v918
        %v933 = vpop.permute.xlu0 %932
        %936 = vset.pattern.permute.xlu0 0
        %937 = vperm.xlu0 %936, %v919
        %v938 = vpop.permute.xlu0 %937
        %941 = vset.pattern.permute.xlu0 0
        %942 = vperm.xlu0 %941, %v920
        %v943 = vpop.permute.xlu0 %942
        %v945 = vmul.f32 %v921, %v928
        %v946 = vmul.f32 %v922, %v933
        %v947 = vmul.f32 %v923, %v938
        %v948 = vmul.f32 %v924, %v943
        %949 = vst.msk [vmem:[%s496] sm:$0xff] %vm549, %v945
        %950 = vst.msk [vmem:[%s496 + $0x8] sm:$0xff] %vm549, %v946
        %951 = vst.msk [vmem:[%s496 + $0x10] sm:$0xff] %vm549, %v947
        %952 = vst.msk [vmem:[%s496 + $0x18] sm:$0xff] %vm549, %v948
      $region44: #{_forward_impl.1} parent=35 // pred_fallthru
        _
      %s953 = smul.u32 2, %s24
      %s954 = smul.u32 2, %s25
      %p955 = scmp.lt.s32.totalorder %s22, 1
      %s956 = scalar_select %p955, %s22, 1
      %p957 = scmp.lt.s32.totalorder %s23, 1
      %s958 = scalar_select %p957, %s23, 1
      %p959 = scmp.lt.s32.totalorder %s953, 1
      %s960 = scalar_select %p959, %s953, 1
      %p961 = scmp.lt.s32.totalorder %s954, 1
      %s962 = scalar_select %p961, %s954, 1
      %s963 = smul.addr %s960, 2
      %s964 = sadd.s32 %s962, %s963
      %s965 = smul.addr %s958, 4
      %s966 = sadd.s32 %s964, %s965
      %s967 = smul.addr %s956, 8
      %s968 = sadd.s32 %s966, %s967
      %s969 = smul.addr %s968, 8
      %s970 = scalar_lea.vmem %s4, %s969
      // Predicated region
      $region45: #{_forward_impl.1} parent=35 // pred_check
        %p971 = pneg %p198
      $region46: #{_forward_impl.1} parent=35 // pred_check_branch
        %973 = sbr.rel (%p971) target = $region48
      $region47: #{_forward_impl.1} parent=35 // pred_region
        %s974 = smul.u32 2, %s24
        %s975 = smul.u32 2, %s25
      $region48: #{_forward_impl.1} parent=35 // pred_fallthru
        _
    $region36: #{_forward_impl.1} parent=5 // pred_fallthru
      _
    %p976 = scmp.le.s32.totalorder 2, %s10
    // Predicated region
    $region49: #{_forward_impl.1} parent=5 // pred_check
      %p977 = pneg %p976
    $region50: #{_forward_impl.1} parent=5 // pred_check_branch
      %979 = sbr.rel (%p977) target = $region52
    $region51: #{_forward_impl.1} parent=5 // pred_region
      %s980 = ssub.s32 %s10, 2
      // Predicated region
      $region53: #{_forward_impl.1} parent=51 // pred_check
        %p981 = pneg %p204
      $region54: #{_forward_impl.1} parent=51 // pred_check_branch
        %983 = sbr.rel (%p981) target = $region56
      $region55: #{_forward_impl.1} parent=51 // pred_region
        %s984 = smul.u32 2, %s29
        %s985 = smul.u32 2, %s30
        %p986 = scmp.lt.s32.totalorder %s27, 1
        %s987 = scalar_select %p986, %s27, 1
        %p988 = scmp.lt.s32.totalorder %s28, 1
        %s989 = scalar_select %p988, %s28, 1
        %p990 = scmp.lt.s32.totalorder %s984, 1
        %s991 = scalar_select %p990, %s984, 1
        %p992 = scmp.lt.s32.totalorder %s985, 1
        %s993 = scalar_select %p992, %s985, 1
        %s994 = smul.addr %s991, 2
        %s995 = sadd.s32 %s993, %s994
        %s996 = smul.addr %s989, 4
        %s997 = sadd.s32 %s995, %s996
        %s998 = smul.addr %s987, 8
        %s999 = sadd.s32 %s997, %s998
        %s1000 = smul.addr %s999, 8
        %s1001 = scalar_lea.vmem %s4, %s1000
      $region56: #{_forward_impl.1} parent=51 // pred_fallthru
        _
    $region52: #{_forward_impl.1} parent=5 // pred_fallthru
      _
  $region6: #{_forward_impl.1} parent=0 // loop_footer
    %s14 = sadd.s32 1, %s10
  $region7: #{_forward_impl.1} parent=0 // loop_footer_branch
    %9 = sbr.rel target = $region3
  $region8: #{_forward_impl.1} parent=0 // loop_exit
    _

</llo_original>
